<compile_context>
chip_gen: v6e
topology: v6e:2x2x1
jax: 0.10.0
libtpu: 0.0.40
codegen_flags: <defaults>
</compile_context>

<pallas_src>
import jax
import jax.numpy as jnp
from jax.experimental import pallas as pl
from jax.experimental.pallas import tpu as pltpu


def softmax_gate_kernel(x_ref, w_ref, b_ref, o_ref):
    # Single fused matmul: [tile_b, E] @ [E, n_pad] -> f32 accumulation,
    # then f32 bias add.  Padded expert lanes carry zero weight columns and a
    # -1e30 bias, so the softmax below assigns them exactly 0 probability.
    logits = jnp.dot(x_ref[...], w_ref[...],
                     preferred_element_type=jnp.float32) + b_ref[...]
    # Numerically stable softmax over the (padded) expert dimension.
    m = jnp.max(logits, axis=-1, keepdims=True)
    e = jnp.exp(logits - m)
    s = jnp.sum(e, axis=-1, keepdims=True)
    # Reciprocal on the EUP slot instead of a VPU divide sequence.
    o_ref[...] = (e * pl.reciprocal(s, approx=False)).astype(o_ref.dtype)


def _round_up(x, m):
    return ((x + m - 1) // m) * m


def softmax_gate(embed, w1, b1, w2, b2, *, tile_b=None,
                 compute_dtype=jnp.float32):
    """Fused (linear1 -> linear2 -> softmax) MoE gate.

    embed: [B, E] float32
    w1:    [E, I] float32, b1: [1, I] float32
    w2:    [I, N] float32, b2: [1, N] float32
    compute_dtype: jnp.float32 (all chips, exact) or jnp.bfloat16
                   (recommended fast path on v6e/v7x; matmul inputs only —
                   accumulation, bias and softmax stay f32).
    returns probs: [B, N] float32
    """
    B, E = embed.shape
    I = w1.shape[1]
    N = w2.shape[1]
    assert w2.shape[0] == I and b1.shape == (1, I) and b2.shape == (1, N)

    # --- fuse the two linears offline (no nonlinearity between them) --------
    # x @ w1 @ w2 + (b1 @ w2 + b2)  ==  x @ W_f + b_f
    w_f = jnp.dot(w1, w2, preferred_element_type=jnp.float32)        # [E, N]
    b_f = jnp.dot(b1, w2, preferred_element_type=jnp.float32) + b2   # [1, N]

    # --- lane-dense expert dim: pad N up to a multiple of 128 ---------------
    n_pad = max(128, _round_up(N, 128))
    if n_pad > N:
        w_f = jnp.pad(w_f, ((0, 0), (0, n_pad - N)))
        b_f = jnp.concatenate(
            [b_f, jnp.full((1, n_pad - N), -1e30, dtype=jnp.float32)], axis=1)

    # --- batch tiling --------------------------------------------------------
    # Multiple of 8 (sublane rule), no inflation of small batches, aim for
    # >= ~4 grid steps on large batches (>= 2 per TensorCore on v7x), cap 512.
    if tile_b is None:
        tile_b = min(512, max(8, _round_up(-(-B // 4), 8)))
    else:
        tile_b = max(8, _round_up(tile_b, 8))

    # VMEM guard (double-buffered x + out, resident fused weight + bias).
    in_item = jnp.dtype(compute_dtype).itemsize
    def _vmem_bytes(tb):
        return (2 * tb * E * in_item          # x double buffer
                + 2 * tb * n_pad * 4          # out double buffer (f32)
                + 2 * E * n_pad * in_item     # fused weight (conservative 2x)
                + 2 * n_pad * 4)              # bias
    budget = 12 * 1024 * 1024                 # leave headroom vs v5e's 16 MiB
    while tile_b > 8 and _vmem_bytes(tile_b) > budget:
        tile_b = max(8, _round_up(tile_b // 2, 8))

    # --- optional bf16 matmul inputs (bias / accumulation / softmax stay f32)
    if compute_dtype != jnp.float32:
        x = embed.astype(compute_dtype)
        w_in = w_f.astype(compute_dtype)
    else:
        x, w_in = embed, w_f

    grid = (pl.cdiv(B, tile_b),)

    out = pl.pallas_call(
        softmax_gate_kernel,
        grid=grid,
        out_shape=jax.ShapeDtypeStruct((B, n_pad), jnp.float32),
        in_specs=[
            pl.BlockSpec((tile_b, E), lambda i: (i, 0)),   # activations: tiled
            pl.BlockSpec((E, n_pad), lambda i: (0, 0)),    # fused W: resident
            pl.BlockSpec((1, n_pad), lambda i: (0, 0)),    # fused b: resident
        ],
        out_specs=pl.BlockSpec((tile_b, n_pad), lambda i: (i, 0)),
        compiler_params=pltpu.CompilerParams(
            dimension_semantics=("parallel",)),            # v7x: 2 TCs
    )(x, w_in, b_f)

    return out[:, :N]


def reference(embed, w1, b1, w2, b2):
    h = embed @ w1 + b1
    logits = h @ w2 + b2
    return jax.nn.softmax(logits, axis=1)


if __name__ == "__main__":
    # Small shapes consistent with the module.
    batch = 8
    embed_dim = 32
    intermediate_dim = 128
    num_experts = 4

    key = jax.random.PRNGKey(0)
    k_x, k_w1, k_b1, k_w2, k_b2, k_x2 = jax.random.split(key, 6)

    embed = jax.random.normal(k_x, (batch, embed_dim), dtype=jnp.float32)

    # Deterministic parameter init (PyTorch-Linear-like uniform scaling).
    lim1 = 1.0 / jnp.sqrt(embed_dim)
    w1 = jax.random.uniform(k_w1, (embed_dim, intermediate_dim),
                            minval=-lim1, maxval=lim1, dtype=jnp.float32)
    b1 = jax.random.uniform(k_b1, (1, intermediate_dim),
                            minval=-lim1, maxval=lim1, dtype=jnp.float32)

    lim2 = 1.0 / jnp.sqrt(intermediate_dim)
    w2 = jax.random.uniform(k_w2, (intermediate_dim, num_experts),
                            minval=-lim2, maxval=lim2, dtype=jnp.float32)
    b2 = jax.random.uniform(k_b2, (1, num_experts),
                            minval=-lim2, maxval=lim2, dtype=jnp.float32)

    # --- main f32 path (exact) ----------------------------------------------
    probs = softmax_gate(embed, w1, b1, w2, b2)
    probs = jax.block_until_ready(probs)
    ref = reference(embed, w1, b1, w2, b2)
    assert probs.shape == (batch, num_experts)
    assert jnp.allclose(jnp.sum(probs, axis=1), 1.0, atol=1e-5)
    assert jnp.allclose(probs, ref, atol=1e-5, rtol=1e-5)

    # --- multi-tile + ragged last block (B=20, tile_b=8 -> grid=(3,)) -------
    embed2 = jax.random.normal(k_x2, (20, embed_dim), dtype=jnp.float32)
    probs2 = jax.block_until_ready(softmax_gate(embed2, w1, b1, w2, b2))
    ref2 = reference(embed2, w1, b1, w2, b2)
    assert probs2.shape == (20, num_experts)
    assert jnp.allclose(jnp.sum(probs2, axis=1), 1.0, atol=1e-5)
    assert jnp.allclose(probs2, ref2, atol=1e-5, rtol=1e-5)

    # --- bf16 fast path (v6e/v7x-friendly), looser tolerance ----------------
    probs_bf16 = jax.block_until_ready(
        softmax_gate(embed, w1, b1, w2, b2, compute_dtype=jnp.bfloat16))
    assert probs_bf16.shape == (batch, num_experts)
    assert jnp.allclose(jnp.sum(probs_bf16, axis=1), 1.0, atol=1e-3)
    assert jnp.allclose(probs_bf16, ref, atol=2e-2, rtol=2e-2)

    print("KERNEL_OK")
</pallas_src>

<mosaic_0001>
module attributes {stable_mosaic.version = 11 : i64} {
  func.func @softmax_gate_kernel(%arg0: i32, %arg1: memref<8x32xf32, #tpu.memory_space<vmem>>, %arg2: memref<32x128xf32, #tpu.memory_space<vmem>>, %arg3: memref<1x128xf32, #tpu.memory_space<vmem>>, %arg4: memref<8x128xf32, #tpu.memory_space<vmem>>) attributes {dimension_semantics = [#tpu.dimension_semantics<parallel>], iteration_bounds = array<i64: 1>, scalar_prefetch = 0 : i64, scratch_operands = 0 : i64, tpu.core_type = #tpu.core_type<tc>, window_params = [{transform_indices = @transform_0, window_bounds = array<i64: 8, 32>}, {pipeline_mode = #tpu.pipeline_mode<synchronous>, transform_indices = @transform_1, window_bounds = array<i64: 32, 128>}, {pipeline_mode = #tpu.pipeline_mode<synchronous>, transform_indices = @transform_2, window_bounds = array<i64: 1, 128>}, {transform_indices = @transform_3, window_bounds = array<i64: 8, 128>}]} {
    %c0 = arith.constant 0 : index
    %c0_0 = arith.constant 0 : index
    %0 = vector.load %arg1[%c0, %c0_0] : memref<8x32xf32, #tpu.memory_space<vmem>>, vector<8x32xf32>
    %c0_1 = arith.constant 0 : index
    %c0_2 = arith.constant 0 : index
    %1 = vector.load %arg2[%c0_1, %c0_2] : memref<32x128xf32, #tpu.memory_space<vmem>>, vector<32x128xf32>
    %cst = arith.constant dense<0.000000e+00> : vector<8x128xf32>
    %2 = tpu.matmul %0, %1, %cst {dimension_numbers = #tpu.dot_dimension_numbers<[1], [0], [0], [1], [0, 0, 1, 1], [], []>} : vector<8x32xf32>, vector<32x128xf32>, vector<8x128xf32> -> vector<8x128xf32>
    %c0_3 = arith.constant 0 : index
    %c0_4 = arith.constant 0 : index
    %3 = vector.load %arg3[%c0_3, %c0_4] : memref<1x128xf32, #tpu.memory_space<vmem>>, vector<1x128xf32>
    %4 = vector.broadcast %3 : vector<1x128xf32> to vector<8x128xf32>
    %5 = arith.addf %2, %4 : vector<8x128xf32>
    %cst_5 = arith.constant dense<0xFF800000> : vector<8xf32>
    %6 = vector.multi_reduction <maximumf>, %5, %cst_5 [1] : vector<8x128xf32> to vector<8xf32>
    %7 = vector.shape_cast %6 : vector<8xf32> to vector<8x1xf32>
    %8 = vector.broadcast %7 : vector<8x1xf32> to vector<8x128xf32>
    %9 = arith.subf %5, %8 : vector<8x128xf32>
    %10 = math.exp %9 : vector<8x128xf32>
    %cst_6 = arith.constant dense<0.000000e+00> : vector<8xf32>
    %11 = vector.multi_reduction <add>, %10, %cst_6 [1] : vector<8x128xf32> to vector<8xf32>
    %12 = vector.shape_cast %11 : vector<8xf32> to vector<8x1xf32>
    %13 = tpu.reciprocal %12 : vector<8x1xf32> -> vector<8x1xf32>
    %14 = vector.broadcast %13 : vector<8x1xf32> to vector<8x128xf32>
    %15 = arith.mulf %10, %14 : vector<8x128xf32>
    %c0_7 = arith.constant 0 : index
    %c0_8 = arith.constant 0 : index
    %16 = vector.load %arg4[%c0_7, %c0_8] : memref<8x128xf32, #tpu.memory_space<vmem>>, vector<8x128xf32>
    tpu.vector_store %arg4[%c0_7, %c0_8], %15 {strides = array<i32>} : memref<8x128xf32, #tpu.memory_space<vmem>>, vector<8x128xf32>,
    return
  }
  func.func @transform_0(%arg0: i32) -> (i32, i32) {
    %c0_i32 = arith.constant 0 : i32
    %c0_i32_0 = arith.constant 0 : i32
    return %arg0, %c0_i32 : i32, i32
  }
  func.func @transform_1(%arg0: i32) -> (i32, i32) {
    %c0_i32 = arith.constant 0 : i32
    %c0_i32_0 = arith.constant 0 : i32
    %c0_i32_1 = arith.constant 0 : i32
    return %c0_i32, %c0_i32_0 : i32, i32
  }
  func.func @transform_2(%arg0: i32) -> (i32, i32) {
    %c0_i32 = arith.constant 0 : i32
    %c0_i32_0 = arith.constant 0 : i32
    %c0_i32_1 = arith.constant 0 : i32
    return %c0_i32, %c0_i32_0 : i32, i32
  }
  func.func @transform_3(%arg0: i32) -> (i32, i32) {
    %c0_i32 = arith.constant 0 : i32
    %c0_i32_0 = arith.constant 0 : i32
    return %arg0, %c0_i32 : i32, i32
  }
}

</mosaic_0001>

<llo_original>
// kernel: tpu_custom_call.1
$region0: #{tpu_custom_call.1}
  #allocation0 [shape = 'u32[]', space=smem, size = 0x4, offset = 0x4, fixed_abs, tag = 'smem constant byte address 0x4 - core index']
  #allocation1 [shape = 'u32[144,128]{1,0:T(1,128)}', space=vmem, size = 0x12000, scoped, tag = 'internal scratch']
  %s0 = inlined_call_operand.hbm [shape: f32[8,32], index: 0, kind: input, shape index: {}]
  %s1 = inlined_call_operand.hbm [shape: f32[32,128], index: 1, kind: input, shape index: {}]
  %s2 = inlined_call_operand.vmem [shape: f32[1,128], index: 2, kind: input, shape index: {}]
  %s3 = inlined_call_operand.hbm [shape: f32[8,128], index: 3, kind: output, shape index: {}]
  %s4 = sld [smem:[#allocation0]]
  $region30: #{tpu_custom_call.1} parent=0
    _
  %s6 = ssub.s32 1, %s4
  %s7 = scalar_select 0, %s6, %s4
  $region1: #{tpu_custom_call.1} parent=0
    #allocation2 [shape = 'u8[4096]{0}', space=vmem, size = 0x1000, scoped, tag = 'input window, operand 0, single buffered']
    #allocation3 [shape = 's32[1]{0}', space=sflag, size = 0x4, scoped, tag = 'scoped memory for tpu_custom_call.1']
    #allocation4 [shape = 's32[1]{0}', space=sflag, size = 0x4, scoped, tag = 'scoped memory for tpu_custom_call.1']
    #allocation5 [shape = 'u8[16384]{0}', space=vmem, size = 0x4000, scoped, tag = 'input window, operand 1, single buffered']
    #allocation6 [shape = 's32[1]{0}', space=sflag, size = 0x4, scoped, tag = 'scoped memory for tpu_custom_call.1']
    #allocation7 [shape = 'u8[4096]{0}', space=vmem, size = 0x1000, scoped, tag = 'output window, operand 0, single buffered']
    %8 = vsyncpa [#allocation3], 0
    %9 = vsyncpa [#allocation6], 0
    %10 = vsyncpa [#allocation4], 0
    // Predicated region
    $region2: #{tpu_custom_call.1} parent=1 // pred_check
      _
    $region3: #{tpu_custom_call.1} parent=1 // pred_check_branch
      %12 = sbr.rel (0) target = $region5
    $region4: #{tpu_custom_call.1} parent=1 // pred_region
      %s14 = ssub.s32 128, 128
      %15 = vsyncadd [#allocation3], %s14
      %s17 = sshll.u32 [#allocation2], 4
      %s18 = int_to_ptr.vmem [resolvable:$true] %s17
      %20 = dma.hbm_to_vmem [thread:$0]  %s0, 128, %s18, [#allocation3]
    $region5: #{tpu_custom_call.1} parent=1 // pred_fallthru
      _
    // Predicated region
    $region6: #{tpu_custom_call.1} parent=1 // pred_check
      _
    $region7: #{tpu_custom_call.1} parent=1 // pred_check_branch
      %22 = sbr.rel (0) target = $region9
    $region8: #{tpu_custom_call.1} parent=1 // pred_region
      %s24 = ssub.s32 512, 512
      %25 = vsyncadd [#allocation6], %s24
      %s26 = sshll.u32 [#allocation5], 4
      %s27 = int_to_ptr.vmem [resolvable:$true] %s26
      %32 = dma.hbm_to_vmem [thread:$0]  %s1, 512, %s27, [#allocation6], 128, 128, 8
    $region9: #{tpu_custom_call.1} parent=1 // pred_fallthru
      _
    // Predicated region
    $region10: #{tpu_custom_call.1} parent=1 // pred_check
      _
    $region11: #{tpu_custom_call.1} parent=1 // pred_check_branch
      %34 = sbr.rel (0) target = $region13
    $region12: #{tpu_custom_call.1} parent=1 // pred_region
      _
    $region13: #{tpu_custom_call.1} parent=1 // pred_fallthru
      _
    // Predicated region
    $region14: #{tpu_custom_call.1} parent=1 // pred_check
      _
    $region15: #{tpu_custom_call.1} parent=1 // pred_check_branch
      %36 = sbr.rel (0) target = $region17
    $region16: #{tpu_custom_call.1} parent=1 // pred_region
      %37 = dma.done [#allocation3], 128
    $region17: #{tpu_custom_call.1} parent=1 // pred_fallthru
      _
    // Predicated region
    $region18: #{tpu_custom_call.1} parent=1 // pred_check
      _
    $region19: #{tpu_custom_call.1} parent=1 // pred_check_branch
      %39 = sbr.rel (0) target = $region21
    $region20: #{tpu_custom_call.1} parent=1 // pred_region
      %40 = dma.done [#allocation6], 512
    $region21: #{tpu_custom_call.1} parent=1 // pred_fallthru
      _
    %v41 = vld [vmem:[#allocation2] sm:$0xff]
    %v42 = vld [vmem:[#allocation5] sm:$0xff]
    %v43 = vld [vmem:[#allocation5 + $0x8] sm:$0xff]
    %v44 = vld [vmem:[#allocation5 + $0x10] sm:$0xff]
    %v45 = vld [vmem:[#allocation5 + $0x18] sm:$0xff]
    %v46 = vld [vmem:[%s2] sm:$0x1]
    %v48 = vlaneseq
    %v49 = vshrl.u32 %v48, 7
    %v50 = vsub.s32 0, %v49
    %v51 = vrot.slane %v46, %v50
    %vm53 = vcmask 261120
    %v55 = vsel %vm53, %v41, 0
    %57 = vmatprep.subr.mxu0 0.0
    %58 = vmatpush1.msra.mxu0 0.0
    %59 = vmatprep.subr.mxu0 0.0
    %60 = vmatpush1.msra.mxu0 0.0
    %61 = vmatprep.subr.mxu0 0.0
    %62 = vmatpush1.msra.mxu0 0.0
    %63 = vmatprep.subr.mxu0 0.0
    %64 = vmatpush1.msra.mxu0 0.0
    %65 = vmatprep.subr.mxu0 0.0
    %66 = vmatpush1.msra.mxu0 0.0
    %67 = vmatprep.subr.mxu0 0.0
    %68 = vmatpush1.msra.mxu0 0.0
    %69 = vmatprep.subr.mxu0 0.0
    %70 = vmatpush1.msra.mxu0 0.0
    %71 = vmatprep.subr.mxu0 0.0
    %72 = vmatpush1.msra.mxu0 0.0
    %73 = vmatprep.subr.mxu0 0.0
    %74 = vmatpush1.msra.mxu0 0.0
    %75 = vmatprep.subr.mxu0 0.0
    %76 = vmatpush1.msra.mxu0 0.0
    %77 = vmatprep.subr.mxu0 0.0
    %78 = vmatpush1.msra.mxu0 0.0
    %79 = vmatprep.subr.mxu0 0.0
    %80 = vmatpush1.msra.mxu0 0.0
    %81 = vmatprep.subr.mxu0 0.0
    %82 = vmatpush1.msra.mxu0 %v45
    %83 = vmatprep.subr.mxu0 0.0
    %84 = vmatpush1.msra.mxu0 %v44
    %85 = vmatprep.subr.mxu0 0.0
    %86 = vmatpush1.msra.mxu0 %v43
    %87 = vmatprep.subr.mxu0 0.0
    %88 = vmatpush1.msra.mxu0 %v42
    %89 = vmatprep.subr.mxu0 0.0
    %90 = vmatpush2.msra.mxu0 0.0
    %91 = vmatprep.subr.mxu0 0.0
    %92 = vmatpush2.msra.mxu0 0.0
    %93 = vmatprep.subr.mxu0 0.0
    %94 = vmatpush2.msra.mxu0 0.0
    %95 = vmatprep.subr.mxu0 0.0
    %96 = vmatpush2.msra.mxu0 0.0
    %97 = vmatprep.subr.mxu0 0.0
    %98 = vmatpush2.msra.mxu0 0.0
    %99 = vmatprep.subr.mxu0 0.0
    %100 = vmatpush2.msra.mxu0 0.0
    %101 = vmatprep.subr.mxu0 0.0
    %102 = vmatpush2.msra.mxu0 0.0
    %103 = vmatprep.subr.mxu0 0.0
    %104 = vmatpush2.msra.mxu0 0.0
    %105 = vmatprep.subr.mxu0 0.0
    %106 = vmatpush2.msra.mxu0 0.0
    %107 = vmatprep.subr.mxu0 0.0
    %108 = vmatpush2.msra.mxu0 0.0
    %109 = vmatprep.subr.mxu0 0.0
    %110 = vmatpush2.msra.mxu0 0.0
    %111 = vmatprep.subr.mxu0 0.0
    %112 = vmatpush2.msra.mxu0 0.0
    %113 = vmatprep.subr.mxu0 0.0
    %114 = vmatpush2.msra.mxu0 0.0
    %115 = vmatprep.subr.mxu0 0.0
    %116 = vmatpush2.msra.mxu0 0.0
    %117 = vmatprep.subr.mxu0 0.0
    %118 = vmatpush2.msra.mxu0 0.0
    %119 = vmatprep.subr.mxu0 0.0
    %120 = vmatpush2.msra.mxu0 0.0
    %121 = vmatprep.mubr.f32.mxu0 0.0
    %122 = vmatmul.mubr.f32.gmra.mxu0 %v55
    %v123 = vpop.f32.mrf.mxu0
    %v124 = vadd.f32 %v51, %v123
    %v125 = vpop.f32.mrf.mxu0
    %126 = vdwg.mxu0
    %127 = vmax.xlane.f32.xlu0 %v124
    %v128 = vpop.xlane.xlu0 %127
    %v129 = vsub.f32 %v124, %v128
    %v130 = vmul.f32 %v129, 1.442695
    %v131 = vpow.pop %v130
    %132 = vadd.xlane.f32.xlu0 %v131
    %v133 = vpop.xlane.xlu0 %132
    %v134 = vrcp.pop %v133
    %v135 = vmul.f32 %v131, %v134
    %136 = vst [vmem:[#allocation7] sm:$0xff] %v135
    // Predicated region
    $region22: #{tpu_custom_call.1} parent=1 // pred_check
      _
    $region23: #{tpu_custom_call.1} parent=1 // pred_check_branch
      %138 = sbr.rel (0) target = $region25
    $region24: #{tpu_custom_call.1} parent=1 // pred_region
      %s140 = ssub.s32 128, 128
      %141 = vsyncadd [#allocation4], %s140
      %s143 = sshll.u32 [#allocation7], 4
      %s144 = int_to_ptr.vmem [resolvable:$true] %s143
      %146 = dma.vmem_to_hbm [thread:$0]  %s144, 128, %s3, [#allocation4]
    $region25: #{tpu_custom_call.1} parent=1 // pred_fallthru
      _
    // Predicated region
    $region26: #{tpu_custom_call.1} parent=1 // pred_check
      _
    $region27: #{tpu_custom_call.1} parent=1 // pred_check_branch
      %148 = sbr.rel (0) target = $region29
    $region28: #{tpu_custom_call.1} parent=1 // pred_region
      %149 = dma.done [#allocation4], 128
    $region29: #{tpu_custom_call.1} parent=1 // pred_fallthru
      _
    %150 = vsyncpa [#allocation3], 1
    %151 = vsyncpa [#allocation6], 1
    %152 = vsyncpa [#allocation4], 1

</llo_original>
